<compile_context>
chip_gen: v5e
topology: v5e:2x2
jax: 0.10.0
libtpu: 0.0.40
codegen_flags: <defaults>
</compile_context>

<pallas_src>
import math

import jax
import jax.numpy as jnp
from jax.experimental import pallas as pl
from jax.experimental.pallas import tpu as pltpu

MNIST_MEAN = 0.1307
MNIST_STD = 0.3081


def _round_up(x, m):
    return (x + m - 1) // m * m


def _blk_bytes(rows, cols, itemsize):
    # VMEM footprint of one (rows, cols) block: last dim pads to 128 lanes,
    # second-to-last to the per-dtype sublane multiple (8 f32, 16 bf16, 32 i8).
    sub = max(8, 8 * (4 // itemsize))
    return _round_up(rows, sub) * _round_up(cols, 128) * itemsize


def _patch_embed_kernel(x_ref, w_ref, b_ref, o_ref):
    # x_ref: (tile_rows, P*W) raw pixel strips
    # w_ref: (P*W, tile_cols) block-diagonal weight with norm scale folded in
    # b_ref: (1, tile_cols)   bias with norm shift folded in
    x = x_ref[...].astype(jnp.float32)          # no-op when input is already f32
    acc = jnp.dot(x, w_ref[...], preferred_element_type=jnp.float32)
    o_ref[...] = (acc + b_ref[...]).astype(o_ref.dtype)


def djb_patch_embedder_forward(x, weight, bias, patch_size, *,
                               out_dtype=jnp.float32,
                               tile_rows_max=2048, tile_cols_max=2048):
    """x: (B, 1, H, W) greyscale 0..255. weight: (E, P*P). bias: (E,)."""
    B, C, H, W = x.shape
    assert C == 1, "single-channel greyscale expected"
    P = patch_size
    assert H % P == 0 and W % P == 0, "patch size must divide image size"
    E = weight.shape[0]
    K = P * P
    assert weight.shape == (E, K)
    nH, nW = H // P, W // P
    num_patches = nH * nW

    M_rows = B * nH          # one GEMM row per horizontal strip of P image rows
    Kc = P * W               # contraction length (one strip, row-major pixels)
    Ncols = nW * E           # output width (nW patches x E embeddings, contiguous)

    # ---- fold to_unit_range + normalise into the weights/bias ---------------
    scale = 1.0 / (255.0 * MNIST_STD)          # (x/255 - m)/s == x*scale + shift
    shift = -MNIST_MEAN / MNIST_STD
    w_ke = weight.astype(jnp.float32).T                      # (K, E)
    w_blk = (scale * w_ke).reshape(P, P, E)                  # (kh, kw, e)
    # Block-diagonal expansion over the nW patches of a strip:
    #   W_big[kh*W + c*P + kw, c*E + e] = scale * W[kh*P + kw, e], zero elsewhere.
    eye = jnp.eye(nW, dtype=jnp.float32)
    w_big = jnp.einsum("cd,kwe->kcwde", eye, w_blk).reshape(Kc, Ncols)
    b_fold = bias.astype(jnp.float32) + shift * w_ke.sum(axis=0)     # (E,)
    b_big = jnp.tile(b_fold, (nW,)).reshape(1, Ncols)

    # ---- free, layout-preserving reshape (no HBM relayout pass) -------------
    xr = x.reshape(M_rows, Kc)

    # ---- tile selection with padded-VMEM accounting -------------------------
    tile_cols = Ncols if Ncols <= tile_cols_max else max(128, tile_cols_max // 128 * 128)

    x_item = jnp.dtype(x.dtype).itemsize
    o_item = jnp.dtype(out_dtype).itemsize

    try:
        hw_vmem = int(pltpu.get_tpu_info().vmem_capacity_bytes)
    except Exception:
        hw_vmem = 64 << 20                     # v7x floor; safe on all generations
    vmem_budget = hw_vmem // 2                 # ~ default scoped VMEM per gen

    fixed = 2 * (_blk_bytes(Kc, tile_cols, 4) + _blk_bytes(1, tile_cols, 4))
    per_row = 2 * (_round_up(Kc, 128) * x_item + _round_up(tile_cols, 128) * o_item)
    rows_vmem = max(8, (vmem_budget - fixed) // per_row // 8 * 8)

    if M_rows < 8:
        tile_rows = M_rows                     # full-dim block (< one sublane tile)
    else:
        # keep >= 2 row-grid steps when possible so both v7x TensorCores get work
        rows_split = _round_up(-(-M_rows // 2), 8)
        tile_rows = max(8, min(tile_rows_max, rows_vmem, rows_split))

    grid = (pl.cdiv(M_rows, tile_rows), pl.cdiv(Ncols, tile_cols))

    flops = 2 * M_rows * Kc * Ncols
    bytes_accessed = (M_rows * Kc * x_item + Kc * Ncols * 4 + Ncols * 4
                      + M_rows * Ncols * o_item)
    vmem_needed = fixed + 2 * (_blk_bytes(tile_rows, Kc, x_item)
                               + _blk_bytes(tile_rows, tile_cols, o_item))
    vmem_limit = int(min(hw_vmem * 3 // 4, max(16 << 20, 2 * vmem_needed)))

    out2 = pl.pallas_call(
        _patch_embed_kernel,
        out_shape=jax.ShapeDtypeStruct((M_rows, Ncols), out_dtype),
        grid=grid,
        in_specs=[
            pl.BlockSpec((tile_rows, Kc), lambda i, j: (i, 0)),   # image strips
            pl.BlockSpec((Kc, tile_cols), lambda i, j: (0, j)),   # folded weight (resident)
            pl.BlockSpec((1, tile_cols), lambda i, j: (0, j)),    # folded bias
        ],
        out_specs=pl.BlockSpec((tile_rows, tile_cols), lambda i, j: (i, j)),
        compiler_params=pltpu.CompilerParams(
            dimension_semantics=("parallel", "parallel"),
            vmem_limit_bytes=vmem_limit),
        cost_estimate=pl.CostEstimate(flops=flops, transcendentals=0,
                                      bytes_accessed=bytes_accessed),
    )(xr, w_big, b_big)

    # Free, contiguous reshape back to (B, num_patches, E) -- no slice, no copy.
    return out2.reshape(B, num_patches, E)


def init_params(key, patch_size, embedding_size):
    """nn.Linear-style uniform init: U(-1/sqrt(fan_in), 1/sqrt(fan_in))."""
    k_w, k_b = jax.random.split(key)
    fan_in = patch_size * patch_size
    bound = 1.0 / math.sqrt(fan_in)
    weight = jax.random.uniform(
        k_w, (embedding_size, fan_in), minval=-bound, maxval=bound,
        dtype=jnp.float32)
    bias = jax.random.uniform(
        k_b, (embedding_size,), minval=-bound, maxval=bound, dtype=jnp.float32)
    return weight, bias


if __name__ == "__main__":
    patch_size = 4
    image_size = 16
    embedding_size = 32
    batch = 2

    key = jax.random.PRNGKey(0)
    k_x, k_p = jax.random.split(key)

    # Greyscale 0..255 single-channel input, as the module asserts.
    x = jax.random.randint(
        k_x, (batch, 1, image_size, image_size), 0, 256).astype(jnp.float32)
    weight, bias = init_params(k_p, patch_size, embedding_size)

    out = djb_patch_embedder_forward(x, weight, bias, patch_size)
    out = jax.block_until_ready(out)

    # Reference: exact PyTorch forward math in plain JAX.
    xn = (x / 255.0 - MNIST_MEAN) / MNIST_STD
    nH = image_size // patch_size
    K = patch_size * patch_size
    ref = xn.reshape(batch, nH, patch_size, nH, patch_size)
    ref = ref.transpose(0, 1, 3, 2, 4).reshape(batch, nH * nH, K)
    ref = ref @ weight.T + bias

    num_patches = (image_size // patch_size) ** 2
    assert out.shape == (batch, num_patches, embedding_size)
    assert jnp.allclose(out, ref, atol=1e-4, rtol=1e-4), \
        float(jnp.max(jnp.abs(out - ref)))
    print("KERNEL_OK")
</pallas_src>

<mosaic_0001>
module attributes {stable_mosaic.version = 11 : i64} {
  func.func @_patch_embed_kernel(%arg0: i32, %arg1: i32, %arg2: memref<8x64xf32, #tpu.memory_space<vmem>>, %arg3: memref<64x128xf32, #tpu.memory_space<vmem>>, %arg4: memref<1x128xf32, #tpu.memory_space<vmem>>, %arg5: memref<8x128xf32, #tpu.memory_space<vmem>>) attributes {dimension_semantics = [#tpu.dimension_semantics<parallel>, #tpu.dimension_semantics<parallel>], iteration_bounds = array<i64: 1, 1>, scalar_prefetch = 0 : i64, scratch_operands = 0 : i64, tpu.core_type = #tpu.core_type<tc>, window_params = [{transform_indices = @transform_0, window_bounds = array<i64: 8, 64>}, {transform_indices = @transform_1, window_bounds = array<i64: 64, 128>}, {transform_indices = @transform_2, window_bounds = array<i64: 1, 128>}, {transform_indices = @transform_3, window_bounds = array<i64: 8, 128>}]} {
    %c0 = arith.constant 0 : index
    %c0_0 = arith.constant 0 : index
    %0 = vector.load %arg2[%c0, %c0_0] : memref<8x64xf32, #tpu.memory_space<vmem>>, vector<8x64xf32>
    %c0_1 = arith.constant 0 : index
    %c0_2 = arith.constant 0 : index
    %1 = vector.load %arg3[%c0_1, %c0_2] : memref<64x128xf32, #tpu.memory_space<vmem>>, vector<64x128xf32>
    %cst = arith.constant dense<0.000000e+00> : vector<8x128xf32>
    %2 = tpu.matmul %0, %1, %cst {dimension_numbers = #tpu.dot_dimension_numbers<[1], [0], [0], [1], [0, 0, 1, 1], [], []>} : vector<8x64xf32>, vector<64x128xf32>, vector<8x128xf32> -> vector<8x128xf32>
    %c0_3 = arith.constant 0 : index
    %c0_4 = arith.constant 0 : index
    %3 = vector.load %arg4[%c0_3, %c0_4] : memref<1x128xf32, #tpu.memory_space<vmem>>, vector<1x128xf32>
    %4 = vector.broadcast %3 : vector<1x128xf32> to vector<8x128xf32>
    %5 = arith.addf %2, %4 : vector<8x128xf32>
    %c0_5 = arith.constant 0 : index
    %c0_6 = arith.constant 0 : index
    %6 = vector.load %arg5[%c0_5, %c0_6] : memref<8x128xf32, #tpu.memory_space<vmem>>, vector<8x128xf32>
    tpu.vector_store %arg5[%c0_5, %c0_6], %5 {strides = array<i32>} : memref<8x128xf32, #tpu.memory_space<vmem>>, vector<8x128xf32>,
    return
  }
  func.func @transform_0(%arg0: i32, %arg1: i32) -> (i32, i32) {
    %c0_i32 = arith.constant 0 : i32
    %c0_i32_0 = arith.constant 0 : i32
    return %arg0, %c0_i32 : i32, i32
  }
  func.func @transform_1(%arg0: i32, %arg1: i32) -> (i32, i32) {
    %c0_i32 = arith.constant 0 : i32
    %c0_i32_0 = arith.constant 0 : i32
    return %c0_i32, %arg1 : i32, i32
  }
  func.func @transform_2(%arg0: i32, %arg1: i32) -> (i32, i32) {
    %c0_i32 = arith.constant 0 : i32
    %c0_i32_0 = arith.constant 0 : i32
    return %c0_i32, %arg1 : i32, i32
  }
  func.func @transform_3(%arg0: i32, %arg1: i32) -> (i32, i32) {
    %c0_i32 = arith.constant 0 : i32
    return %arg0, %arg1 : i32, i32
  }
}

</mosaic_0001>

<llo_original>
// kernel: tpu_custom_call.1
$region0: #{tpu_custom_call.1}
  #allocation0 [shape = 'u32[]', space=smem, size = 0x4, offset = 0x4, fixed_abs, tag = 'smem constant byte address 0x4 - core index']
  #allocation1 [shape = 'u32[72,128]{1,0:T(1,128)}', space=vmem, size = 0x9000, scoped, tag = 'internal scratch']
  %s0 = inlined_call_operand.hbm [shape: f32[8,64], index: 0, kind: input, shape index: {}]
  %s1 = inlined_call_operand.hbm [shape: f32[64,128], index: 1, kind: input, shape index: {}]
  %s2 = inlined_call_operand.vmem [shape: f32[1,128], index: 2, kind: input, shape index: {}]
  %s3 = inlined_call_operand.hbm [shape: f32[8,128], index: 3, kind: output, shape index: {}]
  %s4 = sld [smem:[#allocation0]]
  $region30: #{tpu_custom_call.1} parent=0
    _
  %s6 = ssub.s32 1, %s4
  %s7 = scalar_select 0, %s6, %s4
  $region1: #{tpu_custom_call.1} parent=0
    #allocation2 [shape = 'u8[4096]{0}', space=vmem, size = 0x1000, scoped, tag = 'input window, operand 0, single buffered']
    #allocation3 [shape = 's32[1]{0}', space=sflag, size = 0x4, scoped, tag = 'scoped memory for tpu_custom_call.1']
    #allocation4 [shape = 's32[1]{0}', space=sflag, size = 0x4, scoped, tag = 'scoped memory for tpu_custom_call.1']
    #allocation5 [shape = 'u8[32768]{0}', space=vmem, size = 0x8000, scoped, tag = 'input window, operand 1, single buffered']
    #allocation6 [shape = 's32[1]{0}', space=sflag, size = 0x4, scoped, tag = 'scoped memory for tpu_custom_call.1']
    #allocation7 [shape = 'u8[4096]{0}', space=vmem, size = 0x1000, scoped, tag = 'output window, operand 0, single buffered']
    %8 = vsyncpa [#allocation3], 0
    %9 = vsyncpa [#allocation6], 0
    %10 = vsyncpa [#allocation4], 0
    // Predicated region
    $region2: #{tpu_custom_call.1} parent=1 // pred_check
      _
    $region3: #{tpu_custom_call.1} parent=1 // pred_check_branch
      %12 = sbr.rel (0) target = $region5
    $region4: #{tpu_custom_call.1} parent=1 // pred_region
      %14 = vsyncadd [#allocation3], 0
      %s16 = sshll.u32 %s0, 4
      %s17 = int_to_ptr.hbm [resolvable:$true] %s16
      %s18 = sshll.u32 [#allocation2], 4
      %s19 = int_to_ptr.vmem [resolvable:$true] %s18
      %21 = dma.hbm_to_vmem [thread:$0]  %s17, 128, %s19, [#allocation3]
    $region5: #{tpu_custom_call.1} parent=1 // pred_fallthru
      _
    // Predicated region
    $region6: #{tpu_custom_call.1} parent=1 // pred_check
      _
    $region7: #{tpu_custom_call.1} parent=1 // pred_check_branch
      %23 = sbr.rel (0) target = $region9
    $region8: #{tpu_custom_call.1} parent=1 // pred_region
      %25 = vsyncadd [#allocation6], 0
      %s26 = sshll.u32 %s1, 4
      %s27 = int_to_ptr.hbm [resolvable:$true] %s26
      %s28 = sshll.u32 [#allocation5], 4
      %s29 = int_to_ptr.vmem [resolvable:$true] %s28
      %34 = dma.hbm_to_vmem [thread:$0]  %s27, 1024, %s29, [#allocation6], 128, 128, 8
    $region9: #{tpu_custom_call.1} parent=1 // pred_fallthru
      _
    // Predicated region
    $region10: #{tpu_custom_call.1} parent=1 // pred_check
      _
    $region11: #{tpu_custom_call.1} parent=1 // pred_check_branch
      %36 = sbr.rel (0) target = $region13
    $region12: #{tpu_custom_call.1} parent=1 // pred_region
      _
    $region13: #{tpu_custom_call.1} parent=1 // pred_fallthru
      _
    // Predicated region
    $region14: #{tpu_custom_call.1} parent=1 // pred_check
      _
    $region15: #{tpu_custom_call.1} parent=1 // pred_check_branch
      %38 = sbr.rel (0) target = $region17
    $region16: #{tpu_custom_call.1} parent=1 // pred_region
      %40 = dma.done [#allocation3], 128
    $region17: #{tpu_custom_call.1} parent=1 // pred_fallthru
      _
    // Predicated region
    $region18: #{tpu_custom_call.1} parent=1 // pred_check
      _
    $region19: #{tpu_custom_call.1} parent=1 // pred_check_branch
      %42 = sbr.rel (0) target = $region21
    $region20: #{tpu_custom_call.1} parent=1 // pred_region
      %44 = dma.done [#allocation6], 1024
    $region21: #{tpu_custom_call.1} parent=1 // pred_fallthru
      _
    %v45 = vld [vmem:[#allocation2] sm:$0xff]
    %v46 = vld [vmem:[#allocation5] sm:$0xff]
    %v47 = vld [vmem:[#allocation5 + $0x8] sm:$0xff]
    %v48 = vld [vmem:[#allocation5 + $0x10] sm:$0xff]
    %v49 = vld [vmem:[#allocation5 + $0x18] sm:$0xff]
    %v50 = vld [vmem:[#allocation5 + $0x20] sm:$0xff]
    %v51 = vld [vmem:[#allocation5 + $0x28] sm:$0xff]
    %v52 = vld [vmem:[#allocation5 + $0x30] sm:$0xff]
    %v53 = vld [vmem:[#allocation5 + $0x38] sm:$0xff]
    %v54 = vld [vmem:[%s2] sm:$0x1]
    %v56 = vperm.slane %v54, 0
    %vm58 = vcmask 523264
    %v60 = vsel %vm58, %v45, 0
    %62 = vmatpush.msra.mxu0 0.0
    %63 = vmatpush.msra.mxu0 0.0
    %64 = vmatpush.msra.mxu0 0.0
    %65 = vmatpush.msra.mxu0 0.0
    %66 = vmatpush.msra.mxu0 0.0
    %67 = vmatpush.msra.mxu0 0.0
    %68 = vmatpush.msra.mxu0 0.0
    %69 = vmatpush.msra.mxu0 0.0
    %70 = vmatpush.msra.mxu0 %v53
    %71 = vmatpush.msra.mxu0 %v52
    %72 = vmatpush.msra.mxu0 %v51
    %73 = vmatpush.msra.mxu0 %v50
    %74 = vmatpush.msra.mxu0 %v49
    %75 = vmatpush.msra.mxu0 %v48
    %76 = vmatpush.msra.mxu0 %v47
    %77 = vmatpush.msra.mxu0 %v46
    %78 = vmatmul.f32.gmra.mxu0 %v60
    %v79 = vpop.f32.mrf.mxu0
    %v80 = vadd.f32 %v56, %v79
    %81 = vdwg.mxu0
    %82 = vst [vmem:[#allocation7] sm:$0xff] %v80
    // Predicated region
    $region22: #{tpu_custom_call.1} parent=1 // pred_check
      _
    $region23: #{tpu_custom_call.1} parent=1 // pred_check_branch
      %84 = sbr.rel (0) target = $region25
    $region24: #{tpu_custom_call.1} parent=1 // pred_region
      %86 = vsyncadd [#allocation4], 0
      %s88 = sshll.u32 [#allocation7], 4
      %s89 = int_to_ptr.vmem [resolvable:$true] %s88
      %s90 = sshll.u32 %s3, 4
      %s91 = int_to_ptr.hbm [resolvable:$true] %s90
      %93 = dma.vmem_to_hbm [thread:$0]  %s89, 128, %s91, [#allocation4]
    $region25: #{tpu_custom_call.1} parent=1 // pred_fallthru
      _
    // Predicated region
    $region26: #{tpu_custom_call.1} parent=1 // pred_check
      _
    $region27: #{tpu_custom_call.1} parent=1 // pred_check_branch
      %95 = sbr.rel (0) target = $region29
    $region28: #{tpu_custom_call.1} parent=1 // pred_region
      %97 = dma.done [#allocation4], 128
    $region29: #{tpu_custom_call.1} parent=1 // pred_fallthru
      _
    %98 = vsyncpa [#allocation3], 1
    %99 = vsyncpa [#allocation6], 1
    %100 = vsyncpa [#allocation4], 1

</llo_original>
